<compile_context>
chip_gen: v5e
topology: v5e:2x2
jax: 0.10.0
libtpu: 0.0.40
codegen_flags: <defaults>
</compile_context>

<pallas_src>
import functools

import numpy as np

import jax
import jax.numpy as jnp
from jax.experimental import pallas as pl
from jax.experimental.pallas import tpu as pltpu


# ---------------------------------------------------------------------------
# Per-generation VMEM budgeting (queried lazily, NOT at import time).
#   v5e/v6e: 128 MiB physical -> 96 MiB scoped;  v7x: 64 MiB -> 48 MiB.
# ---------------------------------------------------------------------------
@functools.lru_cache(maxsize=None)
def _vmem_limit_bytes():
    try:
        cap = int(pltpu.get_tpu_info().vmem_capacity_bytes)
    except Exception:
        cap = 64 * 1024 * 1024          # conservative fallback (fits all gens)
    return int(min(cap * 3 // 4, 96 * 1024 * 1024))


def _tile_budget():
    # Budget for pipeline-tiled data inside the scoped limit (headroom for
    # weights / interp matrices / compiler scratch).
    return _vmem_limit_bytes() // 2


def _choose_tile(l, bytes_per_col, fixed_bytes=0):
    """Largest lane tile: full extent if it fits the budget, else the biggest
    128-multiple that does (floor: one 128-lane tile)."""
    budget = max(_tile_budget() - int(fixed_bytes), 4 * 128)
    per_col = 2 * max(int(bytes_per_col), 4)      # x2: double-buffered pipeline
    max_cols = budget // per_col
    if l <= max_cols:
        return int(l)                             # full extent -> always legal
    return int(min(max((max_cols // 128) * 128, 128), l))


def _compiler_params(semantics):
    return pltpu.CompilerParams(dimension_semantics=semantics,
                                vmem_limit_bytes=_vmem_limit_bytes())


# ---------------------------------------------------------------------------
# Host-side helpers: BN folding and linear-interpolation matrices.
# ---------------------------------------------------------------------------
def _conv_bn_params(key, c_in, c_out, ksize, bn_eps=1e-5):
    """Deterministic Conv1d + BatchNorm1d params, eval-mode BN folded into W,b."""
    ks = jax.random.split(key, 6)
    w = 0.1 * jax.random.normal(ks[0], (c_out, c_in, ksize), jnp.float32)
    b = 0.1 * jax.random.normal(ks[1], (c_out,), jnp.float32)
    gamma = 1.0 + 0.1 * jax.random.normal(ks[2], (c_out,), jnp.float32)
    beta = 0.1 * jax.random.normal(ks[3], (c_out,), jnp.float32)
    r_mean = 0.1 * jax.random.normal(ks[4], (c_out,), jnp.float32)
    r_var = 1.0 + 0.1 * jnp.abs(jax.random.normal(ks[5], (c_out,), jnp.float32))
    scale = gamma / jnp.sqrt(r_var + bn_eps)
    w_fold = w * scale[:, None, None]
    b_fold = (b - r_mean) * scale + beta
    return w_fold, b_fold


def _interp_matrix_np(l_in, l_out):
    """(l_out, l_in) matrix M: y[..., j] = sum_i M[j, i] x[..., i] reproduces
    F.interpolate(x, size=l_out, mode='linear', align_corners=True)."""
    m = np.zeros((l_out, l_in), np.float32)
    if l_in == 1 or l_out == 1:
        m[:, 0] = 1.0
        return m
    pos = np.arange(l_out, dtype=np.float64) * (l_in - 1) / (l_out - 1)
    i0 = np.clip(np.floor(pos).astype(np.int64), 0, l_in - 2)
    frac = (pos - i0).astype(np.float32)
    rows = np.arange(l_out)
    m[rows, i0] += 1.0 - frac
    m[rows, i0 + 1] += frac
    return m


# ---------------------------------------------------------------------------
# Kernel 1: x-path.  out = relu(u_skip(x) [+ up_conv(interp(up_x))]),
# optionally skip1 = relu(skip1(x)) from the same x load.
# ---------------------------------------------------------------------------
def _x_path_kernel(*args, has_up, has_skip1):
    it = iter(args)
    x_ref = next(it)
    if has_up:
        upx_ref = next(it)
        mt_ref = next(it)
    w_us_ref = next(it)
    b_us_ref = next(it)
    if has_up:
        w_up_ref = next(it)
        b_up_ref = next(it)
    if has_skip1:
        w_s1_ref = next(it)
        b_s1_ref = next(it)
    out_ref = next(it)
    s1_ref = next(it) if has_skip1 else None

    x = x_ref[...]                                                # (C_in, TL)
    y = jnp.dot(w_us_ref[...], x, preferred_element_type=jnp.float32) + b_us_ref[...]
    if has_up:
        # align_corners linear interpolation fused as a bf16 MXU matmul.
        up_i = jnp.dot(upx_ref[...].astype(jnp.bfloat16), mt_ref[...],
                       preferred_element_type=jnp.float32)        # (C_up, TL)
        y = (y + jnp.dot(w_up_ref[...], up_i, preferred_element_type=jnp.float32)
             + b_up_ref[...])
    out_ref[...] = jnp.maximum(y, 0.0).astype(out_ref.dtype)
    if has_skip1:
        s1 = jnp.dot(w_s1_ref[...], x, preferred_element_type=jnp.float32) + b_s1_ref[...]
        s1_ref[...] = jnp.maximum(s1, 0.0).astype(s1_ref.dtype)


def _x_path(x, up_x, mt_bf16, w_us, b_us, w_up, b_up, w_s1, b_s1):
    has_up = up_x is not None
    has_skip1 = w_s1 is not None
    bsz, c_in, l = x.shape
    chl = w_us.shape[0]

    bytes_per_col = 4 * (c_in + chl) + (4 * c_in if has_skip1 else 0)
    fixed = 0
    if has_up:
        c_up, l_up = up_x.shape[1], up_x.shape[2]
        bytes_per_col += 2 * l_up                 # bf16 interp-matrix columns
        fixed += 2 * 4 * c_up * l_up              # resident up_x slab (dbl-buf)
    tile_l = _choose_tile(l, bytes_per_col, fixed)
    grid = (pl.cdiv(l, tile_l), bsz)              # batch innermost: MT resident

    in_specs = [pl.BlockSpec((pl.Squeezed(), c_in, tile_l), lambda li, bi: (bi, 0, li))]
    operands = [x]
    if has_up:
        in_specs += [pl.BlockSpec((pl.Squeezed(), c_up, l_up), lambda li, bi: (bi, 0, 0)),
                     pl.BlockSpec((l_up, tile_l), lambda li, bi: (0, li))]
        operands += [up_x, mt_bf16]
    in_specs += [pl.BlockSpec((chl, c_in), lambda li, bi: (0, 0)),
                 pl.BlockSpec((chl, 1), lambda li, bi: (0, 0))]
    operands += [w_us, b_us]
    if has_up:
        in_specs += [pl.BlockSpec((chl, chl), lambda li, bi: (0, 0)),
                     pl.BlockSpec((chl, 1), lambda li, bi: (0, 0))]
        operands += [w_up, b_up]
    if has_skip1:
        in_specs += [pl.BlockSpec((c_in, c_in), lambda li, bi: (0, 0)),
                     pl.BlockSpec((c_in, 1), lambda li, bi: (0, 0))]
        operands += [w_s1, b_s1]

    out_spec = pl.BlockSpec((pl.Squeezed(), chl, tile_l), lambda li, bi: (bi, 0, li))
    if has_skip1:
        out_shape = (jax.ShapeDtypeStruct((bsz, chl, l), x.dtype),
                     jax.ShapeDtypeStruct((bsz, c_in, l), x.dtype))
        out_specs = [out_spec,
                     pl.BlockSpec((pl.Squeezed(), c_in, tile_l), lambda li, bi: (bi, 0, li))]
    else:
        out_shape = jax.ShapeDtypeStruct((bsz, chl, l), x.dtype)
        out_specs = out_spec

    result = pl.pallas_call(
        functools.partial(_x_path_kernel, has_up=has_up, has_skip1=has_skip1),
        out_shape=out_shape,
        grid_spec=pltpu.PrefetchScalarGridSpec(
            num_scalar_prefetch=0, grid=grid,
            in_specs=in_specs, out_specs=out_specs),
        compiler_params=_compiler_params(("parallel", "parallel")),
    )(*operands)
    if has_skip1:
        return result[0], result[1]
    return result, None


# ---------------------------------------------------------------------------
# Kernel 2: out-consumers.  skip2 = relu(skip2(out)), cross = relu(cross(out))
# from a single `out` load.
# ---------------------------------------------------------------------------
def _out_consumers_kernel(*args, has_skip2, has_cross):
    it = iter(args)
    out_ref = next(it)
    if has_skip2:
        w2_ref = next(it)
        b2_ref = next(it)
    if has_cross:
        wc_ref = next(it)
        bc_ref = next(it)
    s2_ref = next(it) if has_skip2 else None
    cc_ref = next(it) if has_cross else None

    o = out_ref[...]                                              # (C, TL)
    if has_skip2:
        s2 = jnp.dot(w2_ref[...], o, preferred_element_type=jnp.float32) + b2_ref[...]
        s2_ref[...] = jnp.maximum(s2, 0.0).astype(s2_ref.dtype)
    if has_cross:
        cc = jnp.dot(wc_ref[...], o, preferred_element_type=jnp.float32) + bc_ref[...]
        cc_ref[...] = jnp.maximum(cc, 0.0).astype(cc_ref.dtype)


def _out_consumers(out, w_s2, b_s2, w_cc, b_cc):
    has_skip2 = w_s2 is not None
    has_cross = w_cc is not None
    if not (has_skip2 or has_cross):
        return None, None
    bsz, chl, l = out.shape
    c_s2 = w_s2.shape[0] if has_skip2 else 0
    c_cc = w_cc.shape[0] if has_cross else 0
    tile_l = _choose_tile(l, 4 * (chl + c_s2 + c_cc))
    grid = (pl.cdiv(l, tile_l), bsz)

    in_specs = [pl.BlockSpec((pl.Squeezed(), chl, tile_l), lambda li, bi: (bi, 0, li))]
    operands = [out]
    out_shape = []
    out_specs = []
    if has_skip2:
        in_specs += [pl.BlockSpec((c_s2, chl), lambda li, bi: (0, 0)),
                     pl.BlockSpec((c_s2, 1), lambda li, bi: (0, 0))]
        operands += [w_s2, b_s2]
        out_shape.append(jax.ShapeDtypeStruct((bsz, c_s2, l), out.dtype))
        out_specs.append(pl.BlockSpec((pl.Squeezed(), c_s2, tile_l),
                                      lambda li, bi: (bi, 0, li)))
    if has_cross:
        in_specs += [pl.BlockSpec((c_cc, chl), lambda li, bi: (0, 0)),
                     pl.BlockSpec((c_cc, 1), lambda li, bi: (0, 0))]
        operands += [w_cc, b_cc]
        out_shape.append(jax.ShapeDtypeStruct((bsz, c_cc, l), out.dtype))
        out_specs.append(pl.BlockSpec((pl.Squeezed(), c_cc, tile_l),
                                      lambda li, bi: (bi, 0, li)))

    result = pl.pallas_call(
        functools.partial(_out_consumers_kernel,
                          has_skip2=has_skip2, has_cross=has_cross),
        out_shape=tuple(out_shape),
        grid_spec=pltpu.PrefetchScalarGridSpec(
            num_scalar_prefetch=0, grid=grid,
            in_specs=in_specs, out_specs=out_specs),
        compiler_params=_compiler_params(("parallel", "parallel")),
    )(*operands)
    result = list(result)
    s2 = result.pop(0) if has_skip2 else None
    cc = result.pop(0) if has_cross else None
    return s2, cc


# ---------------------------------------------------------------------------
# Kernel 3: fused res path.
#   r1  = relu( W1 @ out + b1 )                         (res_conv1, k=1)
#   r2  = W2[0] @ r1[:,j-1] + W2[1] @ r1[:,j] + W2[2] @ r1[:,j+1]   (k=3, pad=1)
#   res = (r2 @ M2T) + b2                               (linear interp, bf16 MXU)
# Conv taps via pltpu.roll + zero mask; bias commutes with interpolation
# (interp weights sum to 1).  Tiled over L_out (parallel) + batch.
# ---------------------------------------------------------------------------
def _res_path_kernel(out_ref, w1_ref, b1_ref, w2_ref, b2_ref, m2t_ref, res_ref):
    out = out_ref[...]                                            # (C, L)
    r1 = jnp.maximum(
        jnp.dot(w1_ref[...], out, preferred_element_type=jnp.float32) + b1_ref[...],
        0.0)                                                      # (C, L)
    l = r1.shape[-1]
    col = jax.lax.broadcasted_iota(jnp.int32, r1.shape, 1)
    # k=3 conv taps as lane rotations (XLU) + zero masks (VPU); MXU stays the
    # binding unit so these are effectively free.
    r_prev = jnp.where(col == 0, 0.0, pltpu.roll(r1, 1, 1))           # r1[:, j-1]
    r_next = jnp.where(col == l - 1, 0.0, pltpu.roll(r1, l - 1, 1))   # r1[:, j+1]
    r2 = (jnp.dot(w2_ref[0], r_prev, preferred_element_type=jnp.float32)
          + jnp.dot(w2_ref[1], r1, preferred_element_type=jnp.float32)
          + jnp.dot(w2_ref[2], r_next, preferred_element_type=jnp.float32))
    res = jnp.dot(r2.astype(jnp.bfloat16), m2t_ref[...],
                  preferred_element_type=jnp.float32) + b2_ref[...]
    res_ref[...] = res.astype(res_ref.dtype)


def _res_path(out, w1, b1, w2, b2, m2t_bf16):
    bsz, c, l = out.shape
    c_res = w2.shape[1]
    l_out = m2t_bf16.shape[1]
    # Non-tiled resident bytes: out block (double-buffered) + in-kernel temps
    # (r1, r_prev, r_next, r2) + small weights.
    fixed = 4 * l * (5 * c + c_res) + 4 * (c * c + 3 * c_res * c)
    tile_lo = _choose_tile(l_out, 2 * l + 4 * c_res, fixed)
    grid = (pl.cdiv(l_out, tile_lo), bsz)          # batch innermost: m2t resident

    return pl.pallas_call(
        _res_path_kernel,
        out_shape=jax.ShapeDtypeStruct((bsz, c_res, l_out), out.dtype),
        grid_spec=pltpu.PrefetchScalarGridSpec(
            num_scalar_prefetch=0, grid=grid,
            in_specs=[
                pl.BlockSpec((pl.Squeezed(), c, l), lambda lo, bi: (bi, 0, 0)),
                pl.BlockSpec((c, c), lambda lo, bi: (0, 0)),
                pl.BlockSpec((c, 1), lambda lo, bi: (0, 0)),
                pl.BlockSpec((3, c_res, c), lambda lo, bi: (0, 0, 0)),
                pl.BlockSpec((c_res, 1), lambda lo, bi: (0, 0)),
                pl.BlockSpec((l, tile_lo), lambda lo, bi: (0, lo)),
            ],
            out_specs=pl.BlockSpec((pl.Squeezed(), c_res, tile_lo),
                                   lambda lo, bi: (bi, 0, lo)),
        ),
        compiler_params=_compiler_params(("parallel", "parallel")),
    )(out, w1, b1, w2, b2, m2t_bf16)


# ---------------------------------------------------------------------------
# Module port.
# ---------------------------------------------------------------------------
class UpsampleUnitPallas:
    """JAX/Pallas port of Upsample_unit (eval-mode BN folded, k=1/k=3 convs)."""

    def __init__(self, ind, in_planes, up_size, output_chl_num, output_shape,
                 chl_num=128, gen_skip=False, gen_cross_conv=False, seed=0):
        self.ind = ind
        self.in_planes = in_planes
        self.up_size = up_size           # kept for API parity; forward uses x.shape[-1]
        self.output_chl_num = output_chl_num
        self.output_shape = int(output_shape)
        self.chl_num = chl_num
        self.gen_skip = gen_skip
        self.gen_cross_conv = gen_cross_conv
        self._interp_t_cache = {}        # (l_in, l_out) -> bf16 (l_in, l_out)

        keys = jax.random.split(jax.random.PRNGKey(seed), 8)
        # u_skip: conv1x1 + BN, no relu (relu applied after the optional add)
        w, b = _conv_bn_params(keys[0], in_planes, chl_num, 1)
        self.w_uskip, self.b_uskip = w[:, :, 0], b[:, None]
        if ind > 0:
            w, b = _conv_bn_params(keys[1], chl_num, chl_num, 1)
            self.w_up, self.b_up = w[:, :, 0], b[:, None]
        if gen_skip:
            w, b = _conv_bn_params(keys[2], in_planes, in_planes, 1)
            self.w_skip1, self.b_skip1 = w[:, :, 0], b[:, None]
            w, b = _conv_bn_params(keys[3], chl_num, in_planes, 1)
            self.w_skip2, self.b_skip2 = w[:, :, 0], b[:, None]
        if ind == 4 and gen_cross_conv:
            w, b = _conv_bn_params(keys[4], chl_num, 64, 1)
            self.w_cross, self.b_cross = w[:, :, 0], b[:, None]
        w, b = _conv_bn_params(keys[5], chl_num, chl_num, 1)
        self.w_res1, self.b_res1 = w[:, :, 0], b[:, None]
        w, b = _conv_bn_params(keys[6], chl_num, output_chl_num, 3)
        self.w_res2 = jnp.transpose(w, (2, 0, 1))                 # (3, C_res, C)
        self.b_res2 = b[:, None]

    def _get_interp_t(self, l_in, l_out):
        key = (int(l_in), int(l_out))
        if key not in self._interp_t_cache:
            m = _interp_matrix_np(int(l_in), int(l_out))          # (l_out, l_in)
            self._interp_t_cache[key] = jnp.asarray(m.T, dtype=jnp.bfloat16)
        return self._interp_t_cache[key]

    def __call__(self, x, up_x=None):
        bsz, c_in, l = x.shape
        assert c_in == self.in_planes

        w_s1 = self.w_skip1 if self.gen_skip else None
        b_s1 = self.b_skip1 if self.gen_skip else None
        if self.ind > 0:
            mt = self._get_interp_t(up_x.shape[-1], l)            # (L_up, L) bf16
            out, skip1 = _x_path(x, up_x, mt, self.w_uskip, self.b_uskip,
                                 self.w_up, self.b_up, w_s1, b_s1)
        else:
            out, skip1 = _x_path(x, None, None, self.w_uskip, self.b_uskip,
                                 None, None, w_s1, b_s1)

        m2t = self._get_interp_t(l, self.output_shape)            # (L, L_out) bf16
        res = _res_path(out, self.w_res1, self.b_res1,
                        self.w_res2, self.b_res2, m2t)

        w_s2 = self.w_skip2 if self.gen_skip else None
        b_s2 = self.b_skip2 if self.gen_skip else None
        w_cc = self.w_cross if (self.ind == 4 and self.gen_cross_conv) else None
        b_cc = self.b_cross if (self.ind == 4 and self.gen_cross_conv) else None
        skip2, cross_conv = _out_consumers(out, w_s2, b_s2, w_cc, b_cc)
        return out, res, skip1, skip2, cross_conv


# ---------------------------------------------------------------------------
# Pure-JAX reference (no Pallas, no interpolation matrices) for validation.
# ---------------------------------------------------------------------------
def _ref_pointwise(x, w2d, b2d, relu):
    y = jnp.einsum('oc,bcl->bol', w2d, x) + b2d[None]
    return jnp.maximum(y, 0.0) if relu else y


def _ref_conv3(x, w3, b2d):
    l = x.shape[-1]
    xp = jnp.pad(x, ((0, 0), (0, 0), (1, 1)))
    y = b2d[None]
    for k in range(3):
        y = y + jnp.einsum('oc,bcl->bol', w3[k], xp[:, :, k:k + l])
    return y


def _ref_interp_linear(x, size):
    l_in = x.shape[-1]
    if size == 1:
        return x[..., :1]
    if l_in == 1:
        return jnp.repeat(x, size, axis=-1)
    pos = jnp.arange(size, dtype=jnp.float32) * (l_in - 1) / (size - 1)
    i0 = jnp.clip(jnp.floor(pos).astype(jnp.int32), 0, l_in - 2)
    frac = pos - i0.astype(jnp.float32)
    return x[..., i0] * (1.0 - frac) + x[..., i0 + 1] * frac


def _ref_forward(mod, x, up_x):
    out = _ref_pointwise(x, mod.w_uskip, mod.b_uskip, relu=False)
    if mod.ind > 0:
        up = _ref_interp_linear(up_x, x.shape[-1])
        up = _ref_pointwise(up, mod.w_up, mod.b_up, relu=False)
        out = out + up
    out = jnp.maximum(out, 0.0)
    res = _ref_pointwise(out, mod.w_res1, mod.b_res1, relu=True)
    res = _ref_conv3(res, mod.w_res2, mod.b_res2)
    res = _ref_interp_linear(res, mod.output_shape)
    skip1 = skip2 = cross = None
    if mod.gen_skip:
        skip1 = _ref_pointwise(x, mod.w_skip1, mod.b_skip1, relu=True)
        skip2 = _ref_pointwise(out, mod.w_skip2, mod.b_skip2, relu=True)
    if mod.ind == 4 and mod.gen_cross_conv:
        cross = _ref_pointwise(out, mod.w_cross, mod.b_cross, relu=True)
    return out, res, skip1, skip2, cross


if __name__ == "__main__":
    B, IN_PLANES, CHL, OUT_CHL = 2, 24, 32, 12
    L, L_UP, OUT_SHAPE = 16, 8, 24

    key = jax.random.PRNGKey(0)
    kx, kup = jax.random.split(key)
    x = jax.random.normal(kx, (B, IN_PLANES, L), jnp.float32)
    up_x = jax.random.normal(kup, (B, CHL, L_UP), jnp.float32)

    # Tolerance accommodates the bf16 interpolation matrices / bf16 MXU interp
    # matmuls (rel err ~4e-3) plus MXU vs HIGHEST-precision XLA contraction order.
    def check(name, got, want, atol=2e-2, rtol=2e-2):
        assert got.shape == want.shape, (name, got.shape, want.shape)
        err = float(jnp.max(jnp.abs(got - want)))
        assert jnp.allclose(got, want, atol=atol, rtol=rtol), (name, err)

    # ind == 4 exercises the fused upsample+skip1 path, skip2+cross fusion.
    unit4 = UpsampleUnitPallas(ind=4, in_planes=IN_PLANES, up_size=L_UP,
                               output_chl_num=OUT_CHL, output_shape=OUT_SHAPE,
                               chl_num=CHL, gen_skip=True, gen_cross_conv=True)
    outs4 = jax.block_until_ready(unit4(x, up_x))
    with jax.default_matmul_precision("highest"):
        refs4 = _ref_forward(unit4, x, up_x)
    for name, got, want in zip(("out", "res", "skip1", "skip2", "cross_conv"),
                               outs4, refs4):
        check(name, got, want)

    # ind == 0 exercises the no-upsample branch (up_x unused, as in reference).
    unit0 = UpsampleUnitPallas(ind=0, in_planes=IN_PLANES, up_size=L_UP,
                               output_chl_num=OUT_CHL, output_shape=OUT_SHAPE,
                               chl_num=CHL, gen_skip=False, gen_cross_conv=False)
    outs0 = jax.block_until_ready(unit0(x, up_x))
    with jax.default_matmul_precision("highest"):
        refs0 = _ref_forward(unit0, x, up_x)
    check("out(ind=0)", outs0[0], refs0[0])
    check("res(ind=0)", outs0[1], refs0[1])
    assert outs0[2] is None and outs0[3] is None and outs0[4] is None

    print("KERNEL_OK")
</pallas_src>

<mosaic_0001>
module attributes {stable_mosaic.version = 11 : i64} {
  func.func @_x_path_kernel(%arg0: i32, %arg1: i32, %arg2: memref<1x24x16xf32, #tpu.memory_space<vmem>>, %arg3: memref<1x32x8xf32, #tpu.memory_space<vmem>>, %arg4: memref<8x16xbf16, #tpu.memory_space<vmem>>, %arg5: memref<32x24xf32, #tpu.memory_space<vmem>>, %arg6: memref<32x1xf32, #tpu.memory_space<vmem>>, %arg7: memref<32x32xf32, #tpu.memory_space<vmem>>, %arg8: memref<32x1xf32, #tpu.memory_space<vmem>>, %arg9: memref<24x24xf32, #tpu.memory_space<vmem>>, %arg10: memref<24x1xf32, #tpu.memory_space<vmem>>, %arg11: memref<1x32x16xf32, #tpu.memory_space<vmem>>, %arg12: memref<1x24x16xf32, #tpu.memory_space<vmem>>) attributes {dimension_semantics = [#tpu.dimension_semantics<parallel>, #tpu.dimension_semantics<parallel>], iteration_bounds = array<i64: 1, 2>, scalar_prefetch = 0 : i64, scratch_operands = 0 : i64, tpu.core_type = #tpu.core_type<tc>, window_params = [{transform_indices = @transform_0, window_bounds = array<i64: 1, 24, 16>}, {transform_indices = @transform_1, window_bounds = array<i64: 1, 32, 8>}, {transform_indices = @transform_2, window_bounds = array<i64: 8, 16>}, {pipeline_mode = #tpu.pipeline_mode<synchronous>, transform_indices = @transform_3, window_bounds = array<i64: 32, 24>}, {pipeline_mode = #tpu.pipeline_mode<synchronous>, transform_indices = @transform_4, window_bounds = array<i64: 32, 1>}, {pipeline_mode = #tpu.pipeline_mode<synchronous>, transform_indices = @transform_5, window_bounds = array<i64: 32, 32>}, {pipeline_mode = #tpu.pipeline_mode<synchronous>, transform_indices = @transform_6, window_bounds = array<i64: 32, 1>}, {pipeline_mode = #tpu.pipeline_mode<synchronous>, transform_indices = @transform_7, window_bounds = array<i64: 24, 24>}, {pipeline_mode = #tpu.pipeline_mode<synchronous>, transform_indices = @transform_8, window_bounds = array<i64: 24, 1>}, {transform_indices = @transform_9, window_bounds = array<i64: 1, 32, 16>}, {transform_indices = @transform_10, window_bounds = array<i64: 1, 24, 16>}]} {
    %c0 = arith.constant 0 : index
    %c0_0 = arith.constant 0 : index
    %c0_1 = arith.constant 0 : index
    %0 = vector.load %arg2[%c0, %c0_0, %c0_1] : memref<1x24x16xf32, #tpu.memory_space<vmem>>, vector<1x24x16xf32>
    %1 = vector.shape_cast %0 : vector<1x24x16xf32> to vector<24x16xf32>
    %c0_2 = arith.constant 0 : index
    %c0_3 = arith.constant 0 : index
    %2 = vector.load %arg5[%c0_2, %c0_3] : memref<32x24xf32, #tpu.memory_space<vmem>>, vector<32x24xf32>
    %cst = arith.constant dense<0.000000e+00> : vector<32x16xf32>
    %3 = tpu.matmul %2, %1, %cst {dimension_numbers = #tpu.dot_dimension_numbers<[1], [0], [0], [1], [0, 0, 1, 1], [], []>} : vector<32x24xf32>, vector<24x16xf32>, vector<32x16xf32> -> vector<32x16xf32>
    %c0_4 = arith.constant 0 : index
    %c0_5 = arith.constant 0 : index
    %4 = vector.load %arg6[%c0_4, %c0_5] : memref<32x1xf32, #tpu.memory_space<vmem>>, vector<32x1xf32>
    %5 = vector.broadcast %4 : vector<32x1xf32> to vector<32x16xf32>
    %6 = arith.addf %3, %5 : vector<32x16xf32>
    %c0_6 = arith.constant 0 : index
    %c0_7 = arith.constant 0 : index
    %c0_8 = arith.constant 0 : index
    %7 = vector.load %arg3[%c0_6, %c0_7, %c0_8] : memref<1x32x8xf32, #tpu.memory_space<vmem>>, vector<1x32x8xf32>
    %8 = vector.shape_cast %7 : vector<1x32x8xf32> to vector<32x8xf32>
    %9 = arith.truncf %8 : vector<32x8xf32> to vector<32x8xbf16>
    %c0_9 = arith.constant 0 : index
    %c0_10 = arith.constant 0 : index
    %10 = vector.load %arg4[%c0_9, %c0_10] : memref<8x16xbf16, #tpu.memory_space<vmem>>, vector<8x16xbf16>
    %cst_11 = arith.constant dense<0.000000e+00> : vector<32x16xf32>
    %11 = tpu.matmul %9, %10, %cst_11 {dimension_numbers = #tpu.dot_dimension_numbers<[1], [0], [0], [1], [0, 0, 1, 1], [], []>} : vector<32x8xbf16>, vector<8x16xbf16>, vector<32x16xf32> -> vector<32x16xf32>
    %c0_12 = arith.constant 0 : index
    %c0_13 = arith.constant 0 : index
    %12 = vector.load %arg7[%c0_12, %c0_13] : memref<32x32xf32, #tpu.memory_space<vmem>>, vector<32x32xf32>
    %cst_14 = arith.constant dense<0.000000e+00> : vector<32x16xf32>
    %13 = tpu.matmul %12, %11, %cst_14 {dimension_numbers = #tpu.dot_dimension_numbers<[1], [0], [0], [1], [0, 0, 1, 1], [], []>} : vector<32x32xf32>, vector<32x16xf32>, vector<32x16xf32> -> vector<32x16xf32>
    %14 = arith.addf %6, %13 : vector<32x16xf32>
    %c0_15 = arith.constant 0 : index
    %c0_16 = arith.constant 0 : index
    %15 = vector.load %arg8[%c0_15, %c0_16] : memref<32x1xf32, #tpu.memory_space<vmem>>, vector<32x1xf32>
    %16 = vector.broadcast %15 : vector<32x1xf32> to vector<32x16xf32>
    %17 = arith.addf %14, %16 : vector<32x16xf32>
    %cst_17 = arith.constant 0.000000e+00 : f32
    %18 = vector.broadcast %cst_17 : f32 to vector<32x16xf32>
    %19 = arith.maximumf %17, %18 : vector<32x16xf32>
    %c0_18 = arith.constant 0 : index
    %c0_19 = arith.constant 0 : index
    %c0_20 = arith.constant 0 : index
    %20 = vector.load %arg11[%c0_18, %c0_19, %c0_20] : memref<1x32x16xf32, #tpu.memory_space<vmem>>, vector<1x32x16xf32>
    %21 = vector.shape_cast %20 : vector<1x32x16xf32> to vector<32x16xf32>
    %22 = vector.shape_cast %19 : vector<32x16xf32> to vector<1x32x16xf32>
    tpu.vector_store %arg11[%c0_18, %c0_19, %c0_20], %22 {strides = array<i32>} : memref<1x32x16xf32, #tpu.memory_space<vmem>>, vector<1x32x16xf32>,
    %c0_21 = arith.constant 0 : index
    %c0_22 = arith.constant 0 : index
    %23 = vector.load %arg9[%c0_21, %c0_22] : memref<24x24xf32, #tpu.memory_space<vmem>>, vector<24x24xf32>
    %cst_23 = arith.constant dense<0.000000e+00> : vector<24x16xf32>
    %24 = tpu.matmul %23, %1, %cst_23 {dimension_numbers = #tpu.dot_dimension_numbers<[1], [0], [0], [1], [0, 0, 1, 1], [], []>} : vector<24x24xf32>, vector<24x16xf32>, vector<24x16xf32> -> vector<24x16xf32>
    %c0_24 = arith.constant 0 : index
    %c0_25 = arith.constant 0 : index
    %25 = vector.load %arg10[%c0_24, %c0_25] : memref<24x1xf32, #tpu.memory_space<vmem>>, vector<24x1xf32>
    %26 = vector.broadcast %25 : vector<24x1xf32> to vector<24x16xf32>
    %27 = arith.addf %24, %26 : vector<24x16xf32>
    %cst_26 = arith.constant 0.000000e+00 : f32
    %28 = vector.broadcast %cst_26 : f32 to vector<24x16xf32>
    %29 = arith.maximumf %27, %28 : vector<24x16xf32>
    %c0_27 = arith.constant 0 : index
    %c0_28 = arith.constant 0 : index
    %c0_29 = arith.constant 0 : index
    %30 = vector.load %arg12[%c0_27, %c0_28, %c0_29] : memref<1x24x16xf32, #tpu.memory_space<vmem>>, vector<1x24x16xf32>
    %31 = vector.shape_cast %30 : vector<1x24x16xf32> to vector<24x16xf32>
    %32 = vector.shape_cast %29 : vector<24x16xf32> to vector<1x24x16xf32>
    tpu.vector_store %arg12[%c0_27, %c0_28, %c0_29], %32 {strides = array<i32>} : memref<1x24x16xf32, #tpu.memory_space<vmem>>, vector<1x24x16xf32>,
    return
  }
  func.func @transform_0(%arg0: i32, %arg1: i32) -> (i32, i32, i32) {
    %c0_i32 = arith.constant 0 : i32
    %c0_i32_0 = arith.constant 0 : i32
    return %arg1, %c0_i32, %arg0 : i32, i32, i32
  }
  func.func @transform_1(%arg0: i32, %arg1: i32) -> (i32, i32, i32) {
    %c0_i32 = arith.constant 0 : i32
    %c0_i32_0 = arith.constant 0 : i32
    %c0_i32_1 = arith.constant 0 : i32
    return %arg1, %c0_i32, %c0_i32_0 : i32, i32, i32
  }
  func.func @transform_2(%arg0: i32, %arg1: i32) -> (i32, i32) {
    %c0_i32 = arith.constant 0 : i32
    %c0_i32_0 = arith.constant 0 : i32
    return %c0_i32, %arg0 : i32, i32
  }
  func.func @transform_3(%arg0: i32, %arg1: i32) -> (i32, i32) {
    %c0_i32 = arith.constant 0 : i32
    %c0_i32_0 = arith.constant 0 : i32
    %c0_i32_1 = arith.constant 0 : i32
    return %c0_i32, %c0_i32_0 : i32, i32
  }
  func.func @transform_4(%arg0: i32, %arg1: i32) -> (i32, i32) {
    %c0_i32 = arith.constant 0 : i32
    %c0_i32_0 = arith.constant 0 : i32
    %c0_i32_1 = arith.constant 0 : i32
    return %c0_i32, %c0_i32_0 : i32, i32
  }
  func.func @transform_5(%arg0: i32, %arg1: i32) -> (i32, i32) {
    %c0_i32 = arith.constant 0 : i32
    %c0_i32_0 = arith.constant 0 : i32
    %c0_i32_1 = arith.constant 0 : i32
    return %c0_i32, %c0_i32_0 : i32, i32
  }
  func.func @transform_6(%arg0: i32, %arg1: i32) -> (i32, i32) {
    %c0_i32 = arith.constant 0 : i32
    %c0_i32_0 = arith.constant 0 : i32
    %c0_i32_1 = arith.constant 0 : i32
    return %c0_i32, %c0_i32_0 : i32, i32
  }
  func.func @transform_7(%arg0: i32, %arg1: i32) -> (i32, i32) {
    %c0_i32 = arith.constant 0 : i32
    %c0_i32_0 = arith.constant 0 : i32
    %c0_i32_1 = arith.constant 0 : i32
    return %c0_i32, %c0_i32_0 : i32, i32
  }
  func.func @transform_8(%arg0: i32, %arg1: i32) -> (i32, i32) {
    %c0_i32 = arith.constant 0 : i32
    %c0_i32_0 = arith.constant 0 : i32
    %c0_i32_1 = arith.constant 0 : i32
    return %c0_i32, %c0_i32_0 : i32, i32
  }
  func.func @transform_9(%arg0: i32, %arg1: i32) -> (i32, i32, i32) {
    %c0_i32 = arith.constant 0 : i32
    %c0_i32_0 = arith.constant 0 : i32
    return %arg1, %c0_i32, %arg0 : i32, i32, i32
  }
  func.func @transform_10(%arg0: i32, %arg1: i32) -> (i32, i32, i32) {
    %c0_i32 = arith.constant 0 : i32
    %c0_i32_0 = arith.constant 0 : i32
    return %arg1, %c0_i32, %arg0 : i32, i32, i32
  }
}

</mosaic_0001>

<llo_original>
// kernel: tpu_custom_call.1
$region0: #{tpu_custom_call.1}
  #allocation0 [shape = 'u32[]', space=smem, size = 0x4, offset = 0x4, fixed_abs, tag = 'smem constant byte address 0x4 - core index']
  #allocation1 [shape = 'u32[72,128]{1,0:T(1,128)}', space=vmem, size = 0x9000, scoped, tag = 'internal scratch']
  %s0 = inlined_call_operand.vmem [shape: f32[2,24,16], index: 0, kind: input, shape index: {}]
  %s1 = inlined_call_operand.vmem [shape: f32[2,32,8], index: 1, kind: input, shape index: {}]
  %s2 = inlined_call_operand.vmem [shape: bf16[8,16], index: 2, kind: input, shape index: {}]
  %s3 = inlined_call_operand.vmem [shape: f32[32,24], index: 3, kind: input, shape index: {}]
  %s4 = inlined_call_operand.vmem [shape: f32[32,1], index: 4, kind: input, shape index: {}]
  %s5 = inlined_call_operand.vmem [shape: f32[32,32], index: 5, kind: input, shape index: {}]
  %s6 = inlined_call_operand.vmem [shape: f32[32,1], index: 6, kind: input, shape index: {}]
  %s7 = inlined_call_operand.vmem [shape: f32[24,24], index: 7, kind: input, shape index: {}]
  %s8 = inlined_call_operand.vmem [shape: f32[24,1], index: 8, kind: input, shape index: {}]
  %s9 = inlined_call_operand.vmem [shape: f32[2,32,16], index: 9, kind: output, shape index: {0}]
  %s10 = inlined_call_operand.vmem [shape: f32[2,24,16], index: 10, kind: output, shape index: {1}]
  %11 = xla_tuple %s9, %s10
  %s12 = sld [smem:[#allocation0]]
  $region77: #{tpu_custom_call.1} parent=0
    _
  %s14 = ssub.s32 1, %s12
  %s15 = scalar_select 0, %s14, %s12
  loop: start=0, step=1, limit=4
  $region2: #{tpu_custom_call.1} parent=0 // loop_pre_header
    _
  $region3: #{tpu_custom_call.1} parent=0 // loop_header
    %s17 = sphi 0, %s21
    %p18 = scmp.ge.s32.totalorder %s17, 4
    %s24 = sphi 0, %s36
    %s25 = sphi 0, %s32
    %s26 = sphi 0, %s24
    %s27 = sphi 0, %s25
    %s28 = sphi 0, %s26
    %s29 = sphi 0, %s27
    %s41 = sphi 0, %s43
    %s44 = sphi 0, %s41
    %s45 = sphi 0, %s44
    %s61 = sphi 0, %s45
    %s67 = sphi 0, %s69
    %s70 = sphi 0, %s67
    %s71 = sphi 0, %s70
    %s87 = sphi 0, %s71
    %s93 = sphi 0, %s95
    %s96 = sphi 0, %s93
    %s97 = sphi 0, %s96
    %s113 = sphi 0, %s97
    %s117 = sphi 0, %s117
    %s119 = sphi 0, %s117
    %s120 = sphi 0, %s119
    %s134 = sphi 0, %s120
    %s138 = sphi 0, %s138
    %s140 = sphi 0, %s138
    %s141 = sphi 0, %s140
    %s155 = sphi 0, %s141
    %s159 = sphi 0, %s159
    %s161 = sphi 0, %s159
    %s162 = sphi 0, %s161
    %s176 = sphi 0, %s162
    %s180 = sphi 0, %s180
    %s182 = sphi 0, %s180
    %s183 = sphi 0, %s182
    %s197 = sphi 0, %s183
    %s201 = sphi 0, %s201
    %s203 = sphi 0, %s201
    %s204 = sphi 0, %s203
    %s218 = sphi 0, %s204
    %s222 = sphi 0, %s222
    %s224 = sphi 0, %s222
    %s225 = sphi 0, %s224
    %s239 = sphi 0, %s225
    %s247 = sphi 0, %s249
    %s250 = sphi 0, %s247
    %s251 = sphi 0, %s250
    %s267 = sphi 0, %s251
    %s275 = sphi 0, %s277
    %s278 = sphi 0, %s275
    %s279 = sphi 0, %s278
    %s295 = sphi 0, %s279
  $region4: #{tpu_custom_call.1} parent=0 // loop_header_branch
    %20 = sbr.rel (%p18) target = $region8
  $region5: #{tpu_custom_call.1} parent=0 // loop_body
    %s22 = ssub.s32 %s17, 1
    %s23 = ssub.s32 %s17, 2
    %s30 = sadd.s32 1, %s25
    %p31 = scmp.ge.s32.totalorder %s30, 2
    %s32 = scalar_select %p31, 0, %s30
    %s33 = sadd.s32 1, %s24
    %s34 = scalar_select %p31, %s33, %s24
    %p35 = scmp.ge.s32.totalorder %s34, 1
    %s36 = scalar_select %p35, 0, %s34
    %s37 = ssub.s32 %s25, %s32
    %s38 = ssub.s32 %s24, %s36
    %s39 = sor.u32 %s37, %s38
    %p40 = scmp.eq.s32.totalorder %s39, 0
    %s42 = sadd.s32 %s41, 1
    %s43 = scalar_select %p40, %s41, %s42
    %p46 = pneg %p40
    %p47 = scmp.eq.s32.totalorder %s17, 1
    %p48 = por %p46, %p47
    %p49 = scmp.ne.s32.totalorder %s41, %s44
    %p50 = scmp.eq.s32.totalorder %s17, 0
    %p51 = por %p49, %p50
    %p52 = scmp.ne.s32.totalorder %s41, %s44
    %p53 = scmp.eq.s32.totalorder %s22, 1
    %p54 = por %p52, %p53
    %p55 = scmp.ne.s32.totalorder %s44, %s45
    %p56 = scmp.eq.s32.totalorder %s22, 0
    %p57 = por %p55, %p56
    %p58 = scmp.ne.s32.totalorder %s44, %s45
    %p59 = scmp.eq.s32.totalorder %s23, 1
    %p60 = por %p58, %p59
    %p62 = scmp.ne.s32.totalorder %s45, %s61
    %p63 = scmp.eq.s32.totalorder %s23, 0
    %p64 = por %p62, %p63
    %s65 = ssub.s32 %s25, %s32
    %p66 = scmp.eq.s32.totalorder %s65, 0
    %s68 = sadd.s32 %s67, 1
    %s69 = scalar_select %p66, %s67, %s68
    %p72 = pneg %p66
    %p73 = scmp.eq.s32.totalorder %s17, 1
    %p74 = por %p72, %p73
    %p75 = scmp.ne.s32.totalorder %s67, %s70
    %p76 = scmp.eq.s32.totalorder %s17, 0
    %p77 = por %p75, %p76
    %p78 = scmp.ne.s32.totalorder %s67, %s70
    %p79 = scmp.eq.s32.totalorder %s22, 1
    %p80 = por %p78, %p79
    %p81 = scmp.ne.s32.totalorder %s70, %s71
    %p82 = scmp.eq.s32.totalorder %s22, 0
    %p83 = por %p81, %p82
    %p84 = scmp.ne.s32.totalorder %s70, %s71
    %p85 = scmp.eq.s32.totalorder %s23, 1
    %p86 = por %p84, %p85
    %p88 = scmp.ne.s32.totalorder %s71, %s87
    %p89 = scmp.eq.s32.totalorder %s23, 0
    %p90 = por %p88, %p89
    %s91 = ssub.s32 %s24, %s36
    %p92 = scmp.eq.s32.totalorder %s91, 0
    %s94 = sadd.s32 %s93, 1
    %s95 = scalar_select %p92, %s93, %s94
    %p98 = pneg %p92
    %p99 = scmp.eq.s32.totalorder %s17, 1
    %p100 = por %p98, %p99
    %p101 = scmp.ne.s32.totalorder %s93, %s96
    %p102 = scmp.eq.s32.totalorder %s17, 0
    %p103 = por %p101, %p102
    %p104 = scmp.ne.s32.totalorder %s93, %s96
    %p105 = scmp.eq.s32.totalorder %s22, 1
    %p106 = por %p104, %p105
    %p107 = scmp.ne.s32.totalorder %s96, %s97
    %p108 = scmp.eq.s32.totalorder %s22, 0
    %p109 = por %p107, %p108
    %p110 = scmp.ne.s32.totalorder %s96, %s97
    %p111 = scmp.eq.s32.totalorder %s23, 1
    %p112 = por %p110, %p111
    %p114 = scmp.ne.s32.totalorder %s97, %s113
    %p115 = scmp.eq.s32.totalorder %s23, 0
    %p116 = por %p114, %p115
    %s118 = sadd.s32 %s117, 1
    %p121 = scmp.eq.s32.totalorder %s17, 1
    %p122 = scmp.ne.s32.totalorder %s117, %s119
    %p123 = scmp.eq.s32.totalorder %s17, 0
    %p124 = por %p122, %p123
    %p125 = scmp.ne.s32.totalorder %s117, %s119
    %p126 = scmp.eq.s32.totalorder %s22, 1
    %p127 = por %p125, %p126
    %p128 = scmp.ne.s32.totalorder %s119, %s120
    %p129 = scmp.eq.s32.totalorder %s22, 0
    %p130 = por %p128, %p129
    %p131 = scmp.ne.s32.totalorder %s119, %s120
    %p132 = scmp.eq.s32.totalorder %s23, 1
    %p133 = por %p131, %p132
    %p135 = scmp.ne.s32.totalorder %s120, %s134
    %p136 = scmp.eq.s32.totalorder %s23, 0
    %p137 = por %p135, %p136
    %s139 = sadd.s32 %s138, 1
    %p142 = scmp.eq.s32.totalorder %s17, 1
    %p143 = scmp.ne.s32.totalorder %s138, %s140
    %p144 = scmp.eq.s32.totalorder %s17, 0
    %p145 = por %p143, %p144
    %p146 = scmp.ne.s32.totalorder %s138, %s140
    %p147 = scmp.eq.s32.totalorder %s22, 1
    %p148 = por %p146, %p147
    %p149 = scmp.ne.s32.totalorder %s140, %s141
    %p150 = scmp.eq.s32.totalorder %s22, 0
    %p151 = por %p149, %p150
    %p152 = scmp.ne.s32.totalorder %s140, %s141
    %p153 = scmp.eq.s32.totalorder %s23, 1
    %p154 = por %p152, %p153
    %p156 = scmp.ne.s32.totalorder %s141, %s155
    %p157 = scmp.eq.s32.totalorder %s23, 0
    %p158 = por %p156, %p157
    %s160 = sadd.s32 %s159, 1
    %p163 = scmp.eq.s32.totalorder %s17, 1
    %p164 = scmp.ne.s32.totalorder %s159, %s161
    %p165 = scmp.eq.s32.totalorder %s17, 0
    %p166 = por %p164, %p165
    %p167 = scmp.ne.s32.totalorder %s159, %s161
    %p168 = scmp.eq.s32.totalorder %s22, 1
    %p169 = por %p167, %p168
    %p170 = scmp.ne.s32.totalorder %s161, %s162
    %p171 = scmp.eq.s32.totalorder %s22, 0
    %p172 = por %p170, %p171
    %p173 = scmp.ne.s32.totalorder %s161, %s162
    %p174 = scmp.eq.s32.totalorder %s23, 1
    %p175 = por %p173, %p174
    %p177 = scmp.ne.s32.totalorder %s162, %s176
    %p178 = scmp.eq.s32.totalorder %s23, 0
    %p179 = por %p177, %p178
    %s181 = sadd.s32 %s180, 1
    %p184 = scmp.eq.s32.totalorder %s17, 1
    %p185 = scmp.ne.s32.totalorder %s180, %s182
    %p186 = scmp.eq.s32.totalorder %s17, 0
    %p187 = por %p185, %p186
    %p188 = scmp.ne.s32.totalorder %s180, %s182
    %p189 = scmp.eq.s32.totalorder %s22, 1
    %p190 = por %p188, %p189
    %p191 = scmp.ne.s32.totalorder %s182, %s183
    %p192 = scmp.eq.s32.totalorder %s22, 0
    %p193 = por %p191, %p192
    %p194 = scmp.ne.s32.totalorder %s182, %s183
    %p195 = scmp.eq.s32.totalorder %s23, 1
    %p196 = por %p194, %p195
    %p198 = scmp.ne.s32.totalorder %s183, %s197
    %p199 = scmp.eq.s32.totalorder %s23, 0
    %p200 = por %p198, %p199
    %s202 = sadd.s32 %s201, 1
    %p205 = scmp.eq.s32.totalorder %s17, 1
    %p206 = scmp.ne.s32.totalorder %s201, %s203
    %p207 = scmp.eq.s32.totalorder %s17, 0
    %p208 = por %p206, %p207
    %p209 = scmp.ne.s32.totalorder %s201, %s203
    %p210 = scmp.eq.s32.totalorder %s22, 1
    %p211 = por %p209, %p210
    %p212 = scmp.ne.s32.totalorder %s203, %s204
    %p213 = scmp.eq.s32.totalorder %s22, 0
    %p214 = por %p212, %p213
    %p215 = scmp.ne.s32.totalorder %s203, %s204
    %p216 = scmp.eq.s32.totalorder %s23, 1
    %p217 = por %p215, %p216
    %p219 = scmp.ne.s32.totalorder %s204, %s218
    %p220 = scmp.eq.s32.totalorder %s23, 0
    %p221 = por %p219, %p220
    %s223 = sadd.s32 %s222, 1
    %p226 = scmp.eq.s32.totalorder %s17, 1
    %p227 = scmp.ne.s32.totalorder %s222, %s224
    %p228 = scmp.eq.s32.totalorder %s17, 0
    %p229 = por %p227, %p228
    %p230 = scmp.ne.s32.totalorder %s222, %s224
    %p231 = scmp.eq.s32.totalorder %s22, 1
    %p232 = por %p230, %p231
    %p233 = scmp.ne.s32.totalorder %s224, %s225
    %p234 = scmp.eq.s32.totalorder %s22, 0
    %p235 = por %p233, %p234
    %p236 = scmp.ne.s32.totalorder %s224, %s225
    %p237 = scmp.eq.s32.totalorder %s23, 1
    %p238 = por %p236, %p237
    %p240 = scmp.ne.s32.totalorder %s225, %s239
    %p241 = scmp.eq.s32.totalorder %s23, 0
    %p242 = por %p240, %p241
    %s243 = ssub.s32 %s25, %s32
    %s244 = ssub.s32 %s24, %s36
    %s245 = sor.u32 %s243, %s244
    %p246 = scmp.eq.s32.totalorder %s245, 0
    %s248 = sadd.s32 %s247, 1
    %s249 = scalar_select %p246, %s247, %s248
    %p252 = pneg %p246
    %p253 = scmp.eq.s32.totalorder %s17, 1
    %p254 = por %p252, %p253
    %p255 = scmp.ne.s32.totalorder %s247, %s250
    %p256 = scmp.eq.s32.totalorder %s17, 0
    %p257 = por %p255, %p256
    %p258 = scmp.ne.s32.totalorder %s247, %s250
    %p259 = scmp.eq.s32.totalorder %s22, 1
    %p260 = por %p258, %p259
    %p261 = scmp.ne.s32.totalorder %s250, %s251
    %p262 = scmp.eq.s32.totalorder %s22, 0
    %p263 = por %p261, %p262
    %p264 = scmp.ne.s32.totalorder %s250, %s251
    %p265 = scmp.eq.s32.totalorder %s23, 1
    %p266 = por %p264, %p265
    %p268 = scmp.ne.s32.totalorder %s251, %s267
    %p269 = scmp.eq.s32.totalorder %s23, 0
    %p270 = por %p268, %p269
    %s271 = ssub.s32 %s25, %s32
    %s272 = ssub.s32 %s24, %s36
    %s273 = sor.u32 %s271, %s272
    %p274 = scmp.eq.s32.totalorder %s273, 0
    %s276 = sadd.s32 %s275, 1
    %s277 = scalar_select %p274, %s275, %s276
    %p280 = pneg %p274
    %p281 = scmp.eq.s32.totalorder %s17, 1
    %p282 = por %p280, %p281
    %p283 = scmp.ne.s32.totalorder %s275, %s278
    %p284 = scmp.eq.s32.totalorder %s17, 0
    %p285 = por %p283, %p284
    %p286 = scmp.ne.s32.totalorder %s275, %s278
    %p287 = scmp.eq.s32.totalorder %s22, 1
    %p288 = por %p286, %p287
    %p289 = scmp.ne.s32.totalorder %s278, %s279
    %p290 = scmp.eq.s32.totalorder %s22, 0
    %p291 = por %p289, %p290
    %p292 = scmp.ne.s32.totalorder %s278, %s279
    %p293 = scmp.eq.s32.totalorder %s23, 1
    %p294 = por %p292, %p293
    %p296 = scmp.ne.s32.totalorder %s279, %s295
    %p297 = scmp.eq.s32.totalorder %s23, 0
    %p298 = por %p296, %p297
    %p299 = scmp.le.s32.totalorder 1, %s17
    %p300 = scmp.lt.s32.totalorder %s17, 3
    %p301 = pnand %p299, %p300
    %p302 = pneg %p301
    // Predicated region
    $region9: #{tpu_custom_call.1} parent=5 // pred_check
      _
    $region10: #{tpu_custom_call.1} parent=5 // pred_check_branch
      %304 = sbr.rel (%p301) target = $region12
    $region11: #{tpu_custom_call.1} parent=5 // pred_region
      %s305 = ssub.s32 %s17, 1
      // Predicated region
      $region13: #{tpu_custom_call.1} parent=11 // pred_check
        %p306 = pneg %p109
      $region14: #{tpu_custom_call.1} parent=11 // pred_check_branch
        %308 = sbr.rel (%p306) target = $region16
      $region15: #{tpu_custom_call.1} parent=11 // pred_region
        %p309 = scmp.lt.s32.totalorder %s26, 0
        %s310 = scalar_select %p309, %s26, 0
        %s311 = smul.addr %s310, 4
        %s312 = scalar_lea.vmem %s2, %s311
      $region16: #{tpu_custom_call.1} parent=11 // pred_fallthru
        _
      // Predicated region
      $region17: #{tpu_custom_call.1} parent=11 // pred_check
        %p313 = pneg %p130
      $region18: #{tpu_custom_call.1} parent=11 // pred_check_branch
        %315 = sbr.rel (%p313) target = $region20
      $region19: #{tpu_custom_call.1} parent=11 // pred_region
        _
      $region20: #{tpu_custom_call.1} parent=11 // pred_fallthru
        _
      // Predicated region
      $region21: #{tpu_custom_call.1} parent=11 // pred_check
        %p316 = pneg %p151
      $region22: #{tpu_custom_call.1} parent=11 // pred_check_branch
        %318 = sbr.rel (%p316) target = $region24
      $region23: #{tpu_custom_call.1} parent=11 // pred_region
        _
      $region24: #{tpu_custom_call.1} parent=11 // pred_fallthru
        _
      // Predicated region
      $region25: #{tpu_custom_call.1} parent=11 // pred_check
        %p319 = pneg %p172
      $region26: #{tpu_custom_call.1} parent=11 // pred_check_branch
        %321 = sbr.rel (%p319) target = $region28
      $region27: #{tpu_custom_call.1} parent=11 // pred_region
        _
      $region28: #{tpu_custom_call.1} parent=11 // pred_fallthru
        _
      // Predicated region
      $region29: #{tpu_custom_call.1} parent=11 // pred_check
        %p322 = pneg %p193
      $region30: #{tpu_custom_call.1} parent=11 // pred_check_branch
        %324 = sbr.rel (%p322) target = $region32
      $region31: #{tpu_custom_call.1} parent=11 // pred_region
        _
      $region32: #{tpu_custom_call.1} parent=11 // pred_fallthru
        _
      // Predicated region
      $region33: #{tpu_custom_call.1} parent=11 // pred_check
        %p325 = pneg %p214
      $region34: #{tpu_custom_call.1} parent=11 // pred_check_branch
        %327 = sbr.rel (%p325) target = $region36
      $region35: #{tpu_custom_call.1} parent=11 // pred_region
        _
      $region36: #{tpu_custom_call.1} parent=11 // pred_fallthru
        _
      // Predicated region
      $region37: #{tpu_custom_call.1} parent=11 // pred_check
        %p328 = pneg %p235
      $region38: #{tpu_custom_call.1} parent=11 // pred_check_branch
        %330 = sbr.rel (%p328) target = $region40
      $region39: #{tpu_custom_call.1} parent=11 // pred_region
        _
      $region40: #{tpu_custom_call.1} parent=11 // pred_fallthru
        _
    $region12: #{tpu_custom_call.1} parent=5 // pred_fallthru
      _
    %p331 = scmp.lt.s32.totalorder %s17, 2
    // Predicated region
    $region41: #{tpu_custom_call.1} parent=5 // pred_check
      %p332 = pneg %p331
    $region42: #{tpu_custom_call.1} parent=5 // pred_check_branch
      %334 = sbr.rel (%p332) target = $region44
    $region43: #{tpu_custom_call.1} parent=5 // pred_region
      // Predicated region
      $region45: #{tpu_custom_call.1} parent=43 // pred_check
        %p335 = pneg %p51
      $region46: #{tpu_custom_call.1} parent=43 // pred_check_branch
        %337 = sbr.rel (%p335) target = $region48
      $region47: #{tpu_custom_call.1} parent=43 // pred_region
        %p338 = scmp.lt.s32.totalorder %s25, 1
        %s339 = scalar_select %p338, %s25, 1
        %p340 = scmp.lt.s32.totalorder %s24, 0
        %s341 = scalar_select %p340, %s24, 0
        %s342 = smul.addr %s339, 3
        %s343 = sadd.s32 %s341, %s342
        %s344 = smul.addr %s343, 8
        %s345 = scalar_lea.vmem %s0, %s344
      $region48: #{tpu_custom_call.1} parent=43 // pred_fallthru
        _
      // Predicated region
      $region49: #{tpu_custom_call.1} parent=43 // pred_check
        %p346 = pneg %p77
      $region50: #{tpu_custom_call.1} parent=43 // pred_check_branch
        %348 = sbr.rel (%p346) target = $region52
      $region51: #{tpu_custom_call.1} parent=43 // pred_region
        %p349 = scmp.lt.s32.totalorder %s25, 1
        %s350 = scalar_select %p349, %s25, 1
        %s351 = smul.addr %s350, 4
        %s352 = smul.addr %s351, 8
        %s353 = scalar_lea.vmem %s1, %s352
      $region52: #{tpu_custom_call.1} parent=43 // pred_fallthru
        _
    $region44: #{tpu_custom_call.1} parent=5 // pred_fallthru
      _
    %p354 = scmp.le.s32.totalorder 1, %s17
    %p355 = scmp.lt.s32.totalorder %s17, 3
    %p356 = pnand %p354, %p355
    %p357 = pneg %p356
    // Predicated region
    $region53: #{tpu_custom_call.1} parent=5 // pred_check
      _
    $region54: #{tpu_custom_call.1} parent=5 // pred_check_branch
      %359 = sbr.rel (%p356) target = $region56
    $region55: #{tpu_custom_call.1} parent=5 // pred_region
      %s360 = ssub.s32 %s17, 1
      %p361 = scmp.lt.s32.totalorder %s27, 1
      %s362 = scalar_select %p361, %s27, 1
      %p363 = scmp.lt.s32.totalorder %s26, 0
      %s364 = scalar_select %p363, %s26, 0
      %s365 = smul.addr %s362, 3
      %s366 = sadd.s32 %s364, %s365
      %s367 = smul.addr %s366, 8
      %s368 = scalar_lea.vmem %s0, %s367
      %p369 = pneg %p57
      %p370 = pneg %p54
      %p371 = scmp.lt.s32.totalorder %s27, 1
      %s372 = scalar_select %p371, %s27, 1
      %s373 = smul.addr %s372, 4
      %s374 = smul.addr %s373, 8
      %s375 = scalar_lea.vmem %s1, %s374
      %p376 = pneg %p83
      %p377 = pneg %p80
      %p378 = scmp.lt.s32.totalorder %s26, 0
      %s379 = scalar_select %p378, %s26, 0
      %s380 = smul.addr %s379, 4
      %s381 = scalar_lea.vmem %s2, %s380
      %p382 = pneg %p109
      %p383 = pneg %p106
      %p384 = pneg %p130
      %p385 = pneg %p127
      %p386 = pneg %p151
      %p387 = pneg %p148
      %p388 = pneg %p172
      %p389 = pneg %p169
      %p390 = pneg %p193
      %p391 = pneg %p190
      %p392 = pneg %p214
      %p393 = pneg %p211
      %p394 = pneg %p235
      %p395 = pneg %p232
      %p396 = pneg %p263
      %p397 = pneg %p260
      %p398 = scmp.lt.s32.totalorder %s27, 1
      %s399 = scalar_select %p398, %s27, 1
      %p400 = scmp.lt.s32.totalorder %s26, 0
      %s401 = scalar_select %p400, %s26, 0
      %s402 = smul.addr %s399, 4
      %s403 = sadd.s32 %s401, %s402
      %s404 = smul.addr %s403, 8
      %s405 = scalar_lea.vmem %s9, %s404
      %p406 = pneg %p291
      %p407 = pneg %p288
      %p408 = scmp.lt.s32.totalorder %s27, 1
      %s409 = scalar_select %p408, %s27, 1
      %p410 = scmp.lt.s32.totalorder %s26, 0
      %s411 = scalar_select %p410, %s26, 0
      %s412 = smul.addr %s409, 3
      %s413 = sadd.s32 %s411, %s412
      %s414 = smul.addr %s413, 8
      %s415 = scalar_lea.vmem %s10, %s414
      %p416 = scmp.lt.s32.totalorder %s27, 1
      %s417 = scalar_select %p416, %s27, 1
      %p418 = scmp.lt.s32.totalorder %s26, 0
      %s419 = scalar_select %p418, %s26, 0
      %s420 = smul.addr %s417, 3
      %s421 = sadd.s32 %s419, %s420
      %s422 = smul.addr %s421, 8
      %s423 = scalar_lea.vmem %s0, %s422
      %p424 = scmp.lt.s32.totalorder %s27, 1
      %s425 = scalar_select %p424, %s27, 1
      %s426 = smul.addr %s425, 4
      %s427 = smul.addr %s426, 8
      %s428 = scalar_lea.vmem %s1, %s427
      %p429 = scmp.lt.s32.totalorder %s26, 0
      %s430 = scalar_select %p429, %s26, 0
      %s431 = smul.addr %s430, 4
      %s432 = scalar_lea.vmem %s2, %s431
      %p433 = scmp.lt.s32.totalorder %s27, 1
      %s434 = scalar_select %p433, %s27, 1
      %p435 = scmp.lt.s32.totalorder %s26, 0
      %s436 = scalar_select %p435, %s26, 0
      %s437 = smul.addr %s434, 4
      %s438 = sadd.s32 %s436, %s437
      %s439 = smul.addr %s438, 8
      %s440 = scalar_lea.vmem %s9, %s439
      %p441 = scmp.lt.s32.totalorder %s27, 1
      %s442 = scalar_select %p441, %s27, 1
      %p443 = scmp.lt.s32.totalorder %s26, 0
      %s444 = scalar_select %p443, %s26, 0
      %s445 = smul.addr %s442, 3
      %s446 = sadd.s32 %s444, %s445
      %s447 = smul.addr %s446, 8
      %s448 = scalar_lea.vmem %s10, %s447
      %v450 = vld [vmem:[%s423] sm:$0xff]
      %v451 = vld [vmem:[%s423 + $0x8] sm:$0xff]
      %v452 = vld [vmem:[%s423 + $0x10] sm:$0xff]
      %v453 = vld [vmem:[%s3] sm:$0xff]
      %v454 = vld [vmem:[%s3 + $0x8] sm:$0xff]
      %v455 = vld [vmem:[%s3 + $0x10] sm:$0xff]
      %v456 = vld [vmem:[%s3 + $0x18] sm:$0xff]
      %v457 = vld [vmem:[%s4] sm:$0xff]
      %v458 = vld [vmem:[%s4 + $0x8] sm:$0xff]
      %v459 = vld [vmem:[%s4 + $0x10] sm:$0xff]
      %v460 = vld [vmem:[%s4 + $0x18] sm:$0xff]
      %462 = vset.pattern.permute.xlu0 0
      %463 = vperm.xlu0 %462, %v457
      %v464 = vpop.permute.xlu0 %463
      %467 = vset.pattern.permute.xlu0 0
      %468 = vperm.xlu0 %467, %v458
      %v469 = vpop.permute.xlu0 %468
      %472 = vset.pattern.permute.xlu0 0
      %473 = vperm.xlu0 %472, %v459
      %v474 = vpop.permute.xlu0 %473
      %477 = vset.pattern.permute.xlu0 0
      %478 = vperm.xlu0 %477, %v460
      %v479 = vpop.permute.xlu0 %478
      %vm481 = vcmask 195584
      %v483 = vsel %vm481, %v453, 0
      %v486 = vsel %vm481, %v454, 0
      %v489 = vsel %vm481, %v455, 0
      %v492 = vsel %vm481, %v456, 0
      %494 = vmatpush.msra.mxu0 0.0
      %495 = vmatpush.msra.mxu0 0.0
      %496 = vmatpush.msra.mxu0 0.0
      %497 = vmatpush.msra.mxu0 0.0
      %498 = vmatpush.msra.mxu0 0.0
      %499 = vmatpush.msra.mxu0 0.0
      %500 = vmatpush.msra.mxu0 0.0
      %501 = vmatpush.msra.mxu0 0.0
      %502 = vmatpush.msra.mxu0 0.0
      %503 = vmatpush.msra.mxu0 0.0
      %504 = vmatpush.msra.mxu0 0.0
      %505 = vmatpush.msra.mxu0 0.0
      %506 = vmatpush.msra.mxu0 0.0
      %507 = vmatpush.msra.mxu0 %v452
      %508 = vmatpush.msra.mxu0 %v451
      %509 = vmatpush.msra.mxu0 %v450
      %510 = vmatmul.f32.gmra.mxu0 %v483
      %v511 = vpop.f32.mrf.mxu0
      %v512 = vadd.f32 %v464, %v511
      %513 = vmatmul.f32.gmra.mxu0 %v486
      %v514 = vpop.f32.mrf.mxu0
      %v515 = vadd.f32 %v469, %v514
      %516 = vmatmul.f32.gmra.mxu0 %v489
      %v517 = vpop.f32.mrf.mxu0
      %v518 = vadd.f32 %v474, %v517
      %519 = vmatmul.f32.gmra.mxu0 %v492
      %v520 = vpop.f32.mrf.mxu0
      %v521 = vadd.f32 %v479, %v520
      %522 = vdwg.mxu0
      %v523 = vld [vmem:[%s428] sm:$0xff]
      %v524 = vld [vmem:[%s428 + $0x8] sm:$0xff]
      %v525 = vld [vmem:[%s428 + $0x10] sm:$0xff]
      %v526 = vld [vmem:[%s428 + $0x18] sm:$0xff]
      %v527 = vpack.c.bf16 %v524, %v523
      %v528 = vpack.c.bf16 %v526, %v525
      %v529 = vld [vmem:[%s432] sm:$0xf]
      %vm530 = vcmask 64512
      %v532 = vsel %vm530, %v527, 0
      %v535 = vsel %vm530, %v528, 0
      %vm537 = vcmask 1043456
      %v539 = vsel %vm537, %v529, 0
      %541 = vmatpush.bf16.msra.mxu0 0
      %542 = vmatpush.bf16.msra.mxu0 0
      %543 = vmatpush.bf16.msra.mxu0 0
      %544 = vmatpush.bf16.msra.mxu0 0
      %545 = vmatpush.bf16.msra.mxu0 0
      %546 = vmatpush.bf16.msra.mxu0 0
      %547 = vmatpush.bf16.msra.mxu0 0
      %548 = vmatpush.bf16.msra.mxu0 %v539
      %549 = vmatmul.bf16.gmra.mxu0 %v532
      %v550 = vpop.f32.mrf.mxu0
      %v551 = vadd.f32 0.0, %v550
      %v552 = vpop.f32.mrf.mxu0
      %v553 = vadd.f32 0.0, %v552
      %554 = vmatmul.bf16.gmra.mxu0 %v535
      %v555 = vpop.f32.mrf.mxu0
      %v556 = vadd.f32 0.0, %v555
      %v557 = vpop.f32.mrf.mxu0
      %v558 = vadd.f32 0.0, %v557
      %559 = vdwg.mxu0
      %v560 = vld [vmem:[%s5] sm:$0xff]
      %v561 = vld [vmem:[%s5 + $0x8] sm:$0xff]
      %v562 = vld [vmem:[%s5 + $0x10] sm:$0xff]
      %v563 = vld [vmem:[%s5 + $0x18] sm:$0xff]
      %vm564 = vcmask 261120
      %v566 = vsel %vm564, %v560, 0
      %v569 = vsel %vm564, %v561, 0
      %v572 = vsel %vm564, %v562, 0
      %v575 = vsel %vm564, %v563, 0
      %577 = vmatpush.msra.mxu0 0.0
      %578 = vmatpush.msra.mxu0 0.0
      %579 = vmatpush.msra.mxu0 0.0
      %580 = vmatpush.msra.mxu0 0.0
      %581 = vmatpush.msra.mxu0 0.0
      %582 = vmatpush.msra.mxu0 0.0
      %583 = vmatpush.msra.mxu0 0.0
      %584 = vmatpush.msra.mxu0 0.0
      %585 = vmatpush.msra.mxu0 0.0
      %586 = vmatpush.msra.mxu0 0.0
      %587 = vmatpush.msra.mxu0 0.0
      %588 = vmatpush.msra.mxu0 0.0
      %589 = vmatpush.msra.mxu0 %v558
      %590 = vmatpush.msra.mxu0 %v556
      %591 = vmatpush.msra.mxu0 %v553
      %592 = vmatpush.msra.mxu0 %v551
      %593 = vmatmul.f32.gmra.mxu0 %v566
      %v594 = vpop.f32.mrf.mxu0
      %v595 = vadd.f32 0.0, %v594
      %596 = vmatmul.f32.gmra.mxu0 %v569
      %v597 = vpop.f32.mrf.mxu0
      %v598 = vadd.f32 0.0, %v597
      %599 = vmatmul.f32.gmra.mxu0 %v572
      %v600 = vpop.f32.mrf.mxu0
      %v601 = vadd.f32 0.0, %v600
      %602 = vmatmul.f32.gmra.mxu0 %v575
      %v603 = vpop.f32.mrf.mxu0
      %v604 = vadd.f32 0.0, %v603
      %605 = vdwg.mxu0
      %v606 = vadd.f32 %v512, %v595
      %v607 = vadd.f32 %v515, %v598
      %v608 = vadd.f32 %v518, %v601
      %v609 = vadd.f32 %v521, %v604
      %v610 = vld [vmem:[%s6] sm:$0xff]
      %v611 = vld [vmem:[%s6 + $0x8] sm:$0xff]
      %v612 = vld [vmem:[%s6 + $0x10] sm:$0xff]
      %v613 = vld [vmem:[%s6 + $0x18] sm:$0xff]
      %615 = vset.pattern.permute.xlu0 0
      %616 = vperm.xlu0 %615, %v610
      %v617 = vpop.permute.xlu0 %616
      %620 = vset.pattern.permute.xlu0 0
      %621 = vperm.xlu0 %620, %v611
      %v622 = vpop.permute.xlu0 %621
      %625 = vset.pattern.permute.xlu0 0
      %626 = vperm.xlu0 %625, %v612
      %v627 = vpop.permute.xlu0 %626
      %630 = vset.pattern.permute.xlu0 0
      %631 = vperm.xlu0 %630, %v613
      %v632 = vpop.permute.xlu0 %631
      %v634 = vadd.f32 %v606, %v617
      %v635 = vadd.f32 %v607, %v622
      %v636 = vadd.f32 %v608, %v627
      %v637 = vadd.f32 %v609, %v632
      %v638 = vmax.f32 %v634, 0.0
      %v639 = vmax.f32 %v635, 0.0
      %v640 = vmax.f32 %v636, 0.0
      %v641 = vmax.f32 %v637, 0.0
      %vm642 = vcmask 130048
      %643 = vst.msk [vmem:[%s440] sm:$0xff] %vm642, %v638
      %644 = vst.msk [vmem:[%s440 + $0x8] sm:$0xff] %vm642, %v639
      %645 = vst.msk [vmem:[%s440 + $0x10] sm:$0xff] %vm642, %v640
      %646 = vst.msk [vmem:[%s440 + $0x18] sm:$0xff] %vm642, %v641
      %v647 = vld [vmem:[%s7] sm:$0xff]
      %v648 = vld [vmem:[%s7 + $0x8] sm:$0xff]
      %v649 = vld [vmem:[%s7 + $0x10] sm:$0xff]
      %v650 = vld [vmem:[%s8] sm:$0xff]
      %v651 = vld [vmem:[%s8 + $0x8] sm:$0xff]
      %v652 = vld [vmem:[%s8 + $0x10] sm:$0xff]
      %654 = vset.pattern.permute.xlu0 0
      %655 = vperm.xlu0 %654, %v650
      %v656 = vpop.permute.xlu0 %655
      %659 = vset.pattern.permute.xlu0 0
      %660 = vperm.xlu0 %659, %v651
      %v661 = vpop.permute.xlu0 %660
      %664 = vset.pattern.permute.xlu0 0
      %665 = vperm.xlu0 %664, %v652
      %v666 = vpop.permute.xlu0 %665
      %v669 = vsel %vm481, %v647, 0
      %v672 = vsel %vm481, %v648, 0
      %v675 = vsel %vm481, %v649, 0
      %677 = vmatpush.msra.mxu0 0.0
      %678 = vmatpush.msra.mxu0 0.0
      %679 = vmatpush.msra.mxu0 0.0
      %680 = vmatpush.msra.mxu0 0.0
      %681 = vmatpush.msra.mxu0 0.0
      %682 = vmatpush.msra.mxu0 0.0
      %683 = vmatpush.msra.mxu0 0.0
      %684 = vmatpush.msra.mxu0 0.0
      %685 = vmatpush.msra.mxu0 0.0
      %686 = vmatpush.msra.mxu0 0.0
      %687 = vmatpush.msra.mxu0 0.0
      %688 = vmatpush.msra.mxu0 0.0
      %689 = vmatpush.msra.mxu0 0.0
      %690 = vmatpush.msra.mxu0 %v452
      %691 = vmatpush.msra.mxu0 %v451
      %692 = vmatpush.msra.mxu0 %v450
      %693 = vmatmul.f32.gmra.mxu0 %v669
      %v694 = vpop.f32.mrf.mxu0
      %v695 = vadd.f32 %v656, %v694
      %696 = vmatmul.f32.gmra.mxu0 %v672
      %v697 = vpop.f32.mrf.mxu0
      %v698 = vadd.f32 %v661, %v697
      %699 = vmatmul.f32.gmra.mxu0 %v675
      %v700 = vpop.f32.mrf.mxu0
      %v701 = vadd.f32 %v666, %v700
      %702 = vdwg.mxu0
      %v703 = vmax.f32 %v695, 0.0
      %v704 = vmax.f32 %v698, 0.0
      %v705 = vmax.f32 %v701, 0.0
      %706 = vst.msk [vmem:[%s448] sm:$0xff] %vm642, %v703
      %707 = vst.msk [vmem:[%s448 + $0x8] sm:$0xff] %vm642, %v704
      %708 = vst.msk [vmem:[%s448 + $0x10] sm:$0xff] %vm642, %v705
      %p709 = scmp.lt.s32.totalorder %s27, 1
      %s710 = scalar_select %p709, %s27, 1
      %p711 = scmp.lt.s32.totalorder %s26, 0
      %s712 = scalar_select %p711, %s26, 0
      %s713 = smul.addr %s710, 4
      %s714 = sadd.s32 %s712, %s713
      %s715 = smul.addr %s714, 8
      %s716 = scalar_lea.vmem %s9, %s715
      %p717 = scmp.lt.s32.totalorder %s27, 1
      %s718 = scalar_select %p717, %s27, 1
      %p719 = scmp.lt.s32.totalorder %s26, 0
      %s720 = scalar_select %p719, %s26, 0
      %s721 = smul.addr %s718, 3
      %s722 = sadd.s32 %s720, %s721
      %s723 = smul.addr %s722, 8
      %s724 = scalar_lea.vmem %s10, %s723
      // Predicated region
      $region57: #{tpu_custom_call.1} parent=55 // pred_check
        %p725 = pneg %p260
      $region58: #{tpu_custom_call.1} parent=55 // pred_check_branch
        %727 = sbr.rel (%p725) target = $region60
      $region59: #{tpu_custom_call.1} parent=55 // pred_region
        _
      $region60: #{tpu_custom_call.1} parent=55 // pred_fallthru
        _
      // Predicated region
      $region61: #{tpu_custom_call.1} parent=55 // pred_check
        %p728 = pneg %p288
      $region62: #{tpu_custom_call.1} parent=55 // pred_check_branch
        %730 = sbr.rel (%p728) target = $region64
      $region63: #{tpu_custom_call.1} parent=55 // pred_region
        _
      $region64: #{tpu_custom_call.1} parent=55 // pred_fallthru
        _
    $region56: #{tpu_custom_call.1} parent=5 // pred_fallthru
      _
    %p731 = scmp.le.s32.totalorder 2, %s17
    // Predicated region
    $region65: #{tpu_custom_call.1} parent=5 // pred_check
      %p732 = pneg %p731
    $region66: #{tpu_custom_call.1} parent=5 // pred_check_branch
      %734 = sbr.rel (%p732) target = $region68
    $region67: #{tpu_custom_call.1} parent=5 // pred_region
      %s735 = ssub.s32 %s17, 2
      // Predicated region
      $region69: #{tpu_custom_call.1} parent=67 // pred_check
        %p736 = pneg %p266
      $region70: #{tpu_custom_call.1} parent=67 // pred_check_branch
        %738 = sbr.rel (%p736) target = $region72
      $region71: #{tpu_custom_call.1} parent=67 // pred_region
        %p739 = scmp.lt.s32.totalorder %s29, 1
        %s740 = scalar_select %p739, %s29, 1
        %p741 = scmp.lt.s32.totalorder %s28, 0
        %s742 = scalar_select %p741, %s28, 0
        %s743 = smul.addr %s740, 4
        %s744 = sadd.s32 %s742, %s743
        %s745 = smul.addr %s744, 8
        %s746 = scalar_lea.vmem %s9, %s745
      $region72: #{tpu_custom_call.1} parent=67 // pred_fallthru
        _
      // Predicated region
      $region73: #{tpu_custom_call.1} parent=67 // pred_check
        %p747 = pneg %p294
      $region74: #{tpu_custom_call.1} parent=67 // pred_check_branch
        %749 = sbr.rel (%p747) target = $region76
      $region75: #{tpu_custom_call.1} parent=67 // pred_region
        %p750 = scmp.lt.s32.totalorder %s29, 1
        %s751 = scalar_select %p750, %s29, 1
        %p752 = scmp.lt.s32.totalorder %s28, 0
        %s753 = scalar_select %p752, %s28, 0
        %s754 = smul.addr %s751, 3
        %s755 = sadd.s32 %s753, %s754
        %s756 = smul.addr %s755, 8
        %s757 = scalar_lea.vmem %s10, %s756
      $region76: #{tpu_custom_call.1} parent=67 // pred_fallthru
        _
    $region68: #{tpu_custom_call.1} parent=5 // pred_fallthru
      _
  $region6: #{tpu_custom_call.1} parent=0 // loop_footer
    %s21 = sadd.s32 1, %s17
  $region7: #{tpu_custom_call.1} parent=0 // loop_footer_branch
    %16 = sbr.rel target = $region3
  $region8: #{tpu_custom_call.1} parent=0 // loop_exit
    _

</llo_original>
